<compile_context>
chip_gen: v7x
topology: tpu7x:2x2x1
jax: 0.10.0
libtpu: 0.0.40
codegen_flags: <defaults>
</compile_context>

<pallas_src>
import functools

import jax
import jax.numpy as jnp
from jax.experimental import pallas as pl
from jax.experimental.pallas import tpu as pltpu


def _round_up(x, m):
    return (x + m - 1) // m * m


def _contrastive_kernel(x1_ref, x2_ref, lbl_ref, out_ref, sq_acc,
                        *, margin, eps, batch, feat, tb, td):
    i = pl.program_id(0)          # batch-tile index ("parallel")
    j = pl.program_id(1)          # feature-tile index ("arbitrary", innermost)
    nd = pl.num_programs(1)

    @pl.when(j == 0)
    def _():
        sq_acc[...] = jnp.zeros_like(sq_acc)

    def _accumulate(mask_cols):
        x1 = x1_ref[...].astype(jnp.float32)       # (tb, td)
        x2 = x2_ref[...].astype(jnp.float32)
        diff = x1 - x2 + eps                       # F.pairwise_distance eps
        if mask_cols:                              # mask padded feature columns
            col = jax.lax.broadcasted_iota(jnp.int32, (tb, td), 1) + j * td
            diff = jnp.where(col < feat, diff, 0.0)
        sq = diff * diff                           # (tb, td)
        if td % 128 == 0:
            # Lane-parallel accumulate: pure 128-wide VPU adds, no per-step
            # cross-lane reduce, dense (tb, 128) scratch read-modify-write.
            sq_acc[...] += sq.reshape(tb, td // 128, 128).sum(axis=1)
        else:
            # Narrow feature tile (td == D < 128): single cross-lane reduce,
            # deposited densely into lane 0 of the accumulator.
            s = jnp.sum(sq, axis=-1, keepdims=True)            # (tb, 1)
            lane = jax.lax.broadcasted_iota(jnp.int32, (tb, 128), 1)
            sq_acc[...] += jnp.where(lane == 0, s, 0.0)

    if feat % td != 0:
        # Padding mask is only needed on the last feature tile.
        @pl.when(j == nd - 1)
        def _():
            _accumulate(True)

        @pl.when(j != nd - 1)
        def _():
            _accumulate(False)
    else:
        _accumulate(False)

    @pl.when(j == nd - 1)
    def _():
        lbl = lbl_ref[...].astype(jnp.float32)                 # (tb, 1)
        sq = jnp.sum(sq_acc[...], axis=-1, keepdims=True)      # (tb, 1), one XLU reduce
        dist = jnp.sqrt(sq)                                    # EUP, off the DMA path
        hinge = jnp.maximum(margin - dist, 0.0)
        per_pair = (1.0 - lbl) * sq + lbl * (hinge * hinge)
        if batch % tb != 0:                    # mask padded batch rows
            row = jax.lax.broadcasted_iota(jnp.int32, (tb, 1), 0) + i * tb
            per_pair = jnp.where(row < batch, per_pair, 0.0)
        tile_sum = jnp.sum(per_pair)
        # Dense (1, 1, 128) store: tile sum in lane 0, zeros elsewhere.  Each
        # batch tile owns a disjoint block (required for megacore "parallel").
        lane = jax.lax.broadcasted_iota(jnp.int32, out_ref.shape, 2)
        out_ref[...] = jnp.where(lane == 0, tile_sum, 0.0).astype(out_ref.dtype)


def contrastive_loss(output1, output2, label, margin=2.0, eps=1e-6):
    """Pallas TPU implementation of ContrastiveLoss.forward."""
    assert output1.shape == output2.shape and output1.ndim == 2
    B, D = output1.shape
    itemsize = jnp.dtype(output1.dtype).itemsize
    sublane = {4: 8, 2: 16, 1: 32}.get(itemsize, 8)

    # --- Tile sizing: cap each input block at ~2 MiB (HBM roofline already
    # saturates there); do NOT scale blocks up to the VMEM capacity. ---------
    target_block_bytes = 2 * 1024 * 1024

    # Feature-tile width: keep D in a single tile if a row fits the per-row
    # budget (so tb >= sublane keeps the block <= ~2 MiB); otherwise tile the
    # feature axis in multiples of 128 lanes.
    max_td_bytes = target_block_bytes // sublane
    if _round_up(D, 128) * itemsize <= max_td_bytes:
        td = D
    else:
        td = max(128, (max_td_bytes // itemsize) // 128 * 128)
    td_pad = _round_up(td, 128)            # VMEM lane padding

    # Batch-tile height: rows per ~2 MiB block, multiple of the sublane pack.
    tb = max(sublane, (target_block_bytes // (td_pad * itemsize)) // sublane * sublane)
    tb = min(tb, _round_up(B, sublane))
    # v7x megacore: guarantee >= 2 balanced batch tiles whenever B allows it
    # (the batch axis is the only "parallel" axis).  No-op on v5e/v6e.
    tb = min(tb, _round_up((B + 1) // 2, sublane))
    tb = max(tb, sublane)

    nb = (B + tb - 1) // tb
    nd = (D + td - 1) // td

    label2d = label.reshape(B, 1).astype(jnp.float32)

    kernel = functools.partial(_contrastive_kernel, margin=float(margin),
                               eps=float(eps), batch=B, feat=D, tb=tb, td=td)

    # Advisory cost hint so XLA can overlap this mem-bound call in a larger graph.
    cost = pl.CostEstimate(
        flops=int(4 * B * D),
        transcendentals=int(B),
        bytes_accessed=int(2 * B * D * itemsize + B * 4 + nb * 128 * 4),
    )

    partials = pl.pallas_call(
        kernel,
        out_shape=jax.ShapeDtypeStruct((nb, 1, 128), jnp.float32),
        grid_spec=pltpu.PrefetchScalarGridSpec(
            num_scalar_prefetch=0,
            grid=(nb, nd),
            in_specs=[
                pl.BlockSpec((tb, td), lambda i, j: (i, j)),   # x1 (native dtype)
                pl.BlockSpec((tb, td), lambda i, j: (i, j)),   # x2 (native dtype)
                pl.BlockSpec((tb, 1), lambda i, j: (i, 0)),    # label
            ],
            out_specs=pl.BlockSpec((1, 1, 128), lambda i, j: (i, 0, 0)),
            scratch_shapes=[pltpu.VMEM((tb, 128), jnp.float32)],
        ),
        compiler_params=pltpu.CompilerParams(
            dimension_semantics=("parallel", "arbitrary"),
            vmem_limit_bytes=32 * 1024 * 1024,   # >=16 MiB headroom on v7x
        ),
        cost_estimate=cost,
    )(output1, output2, label2d)

    # Tiny epilogue in plain JAX: only lane 0 of each partial block is nonzero,
    # so a dense sum over the whole (nb, 1, 128) slab is exact; then batch mean.
    return jnp.sum(partials) / B


def _reference_loss(output1, output2, label, margin=2.0, eps=1e-6):
    # Pure-JAX reference mirroring the PyTorch module, for verification.
    diff = output1.astype(jnp.float32) - output2.astype(jnp.float32) + eps
    d = jnp.sqrt(jnp.sum(diff * diff, axis=-1))
    return jnp.mean((1.0 - label) * d * d
                    + label * jnp.square(jnp.maximum(margin - d, 0.0)))


if __name__ == "__main__":
    key = jax.random.PRNGKey(0)
    k1, k2, k3 = jax.random.split(key, 3)

    B, D = 8, 32  # small shapes: batch of 8 pairs of 32-d embeddings
    output1 = jax.random.normal(k1, (B, D), dtype=jnp.float32)
    output2 = jax.random.normal(k2, (B, D), dtype=jnp.float32)
    label = jax.random.bernoulli(k3, 0.5, (B,)).astype(jnp.float32)

    loss = contrastive_loss(output1, output2, label, margin=2.0)
    loss = jax.block_until_ready(loss)

    ref = _reference_loss(output1, output2, label, margin=2.0)
    assert jnp.allclose(loss, ref, atol=1e-5, rtol=1e-5), (loss, ref)

    print("KERNEL_OK")
</pallas_src>

<mosaic_0001>
module attributes {stable_mosaic.version = 11 : i64} {
  func.func @_contrastive_kernel(%arg0: i32, %arg1: i32, %arg2: memref<8x32xf32, #tpu.memory_space<vmem>>, %arg3: memref<8x32xf32, #tpu.memory_space<vmem>>, %arg4: memref<8x1xf32, #tpu.memory_space<vmem>>, %arg5: memref<1x1x128xf32, #tpu.memory_space<vmem>>, %arg6: memref<8x128xf32, #tpu.memory_space<vmem>>) attributes {dimension_semantics = [#tpu.dimension_semantics<parallel>, #tpu.dimension_semantics<arbitrary>], iteration_bounds = array<i64: 1, 1>, scalar_prefetch = 0 : i64, scratch_operands = 1 : i64, tpu.core_type = #tpu.core_type<tc>, window_params = [{transform_indices = @transform_0, window_bounds = array<i64: 8, 32>}, {transform_indices = @transform_1, window_bounds = array<i64: 8, 32>}, {transform_indices = @transform_2, window_bounds = array<i64: 8, 1>}, {transform_indices = @transform_3, window_bounds = array<i64: 1, 1, 128>}]} {
    %c0_i32 = arith.constant 0 : i32
    %0 = arith.cmpi eq, %arg1, %c0_i32 : i32
    %1 = arith.extui %0 : i1 to i32
    %c0_i32_0 = arith.constant 0 : i32
    %2 = arith.cmpi ne, %1, %c0_i32_0 : i32
    scf.if %2 {
      %cst_13 = arith.constant 0.000000e+00 : f32
      %24 = vector.broadcast %cst_13 : f32 to vector<8x128xf32>
      %c0_14 = arith.constant 0 : index
      %c0_15 = arith.constant 0 : index
      %25 = vector.load %arg6[%c0_14, %c0_15] : memref<8x128xf32, #tpu.memory_space<vmem>>, vector<8x128xf32>
      tpu.vector_store %arg6[%c0_14, %c0_15], %24 {strides = array<i32>} : memref<8x128xf32, #tpu.memory_space<vmem>>, vector<8x128xf32>,
    } else {
    }
    %c0 = arith.constant 0 : index
    %c0_1 = arith.constant 0 : index
    %3 = vector.load %arg2[%c0, %c0_1] : memref<8x32xf32, #tpu.memory_space<vmem>>, vector<8x32xf32>
    %c0_2 = arith.constant 0 : index
    %c0_3 = arith.constant 0 : index
    %4 = vector.load %arg3[%c0_2, %c0_3] : memref<8x32xf32, #tpu.memory_space<vmem>>, vector<8x32xf32>
    %5 = arith.subf %3, %4 : vector<8x32xf32>
    %cst = arith.constant 9.99999997E-7 : f32
    %6 = vector.broadcast %cst : f32 to vector<8x32xf32>
    %7 = arith.addf %5, %6 : vector<8x32xf32>
    %8 = arith.mulf %7, %7 : vector<8x32xf32>
    %cst_4 = arith.constant dense<0.000000e+00> : vector<8xf32>
    %9 = vector.multi_reduction <add>, %8, %cst_4 [1] : vector<8x32xf32> to vector<8xf32>
    %10 = vector.shape_cast %9 : vector<8xf32> to vector<8x1xf32>
    %11 = tpu.iota {dimensions = array<i32: 1>} : vector<8x128xi32>
    %c0_5 = arith.constant 0 : index
    %c0_6 = arith.constant 0 : index
    %12 = vector.load %arg6[%c0_5, %c0_6] : memref<8x128xf32, #tpu.memory_space<vmem>>, vector<8x128xf32>
    %c0_i32_7 = arith.constant 0 : i32
    %13 = vector.broadcast %c0_i32_7 : i32 to vector<8x128xi32>
    %14 = arith.cmpi eq, %11, %13 : vector<8x128xi32>
    %cst_8 = arith.constant 0.000000e+00 : f32
    %15 = vector.shape_cast %10 : vector<8x1xf32> to vector<8x1xf32>
    %16 = vector.broadcast %15 : vector<8x1xf32> to vector<8x128xf32>
    %17 = vector.broadcast %cst_8 : f32 to vector<8x128xf32>
    %18 = arith.select %14, %16, %17 : vector<8x128xi1>, vector<8x128xf32>
    %19 = arith.addf %12, %18 : vector<8x128xf32>
    %c0_9 = arith.constant 0 : index
    %c0_10 = arith.constant 0 : index
    %20 = vector.load %arg6[%c0_9, %c0_10] : memref<8x128xf32, #tpu.memory_space<vmem>>, vector<8x128xf32>
    tpu.vector_store %arg6[%c0_9, %c0_10], %19 {strides = array<i32>} : memref<8x128xf32, #tpu.memory_space<vmem>>, vector<8x128xf32>,
    %c0_i32_11 = arith.constant 0 : i32
    %21 = arith.cmpi eq, %arg1, %c0_i32_11 : i32
    %22 = arith.extui %21 : i1 to i32
    %c0_i32_12 = arith.constant 0 : i32
    %23 = arith.cmpi ne, %22, %c0_i32_12 : i32
    scf.if %23 {
      %c0_13 = arith.constant 0 : index
      %c0_14 = arith.constant 0 : index
      %24 = vector.load %arg4[%c0_13, %c0_14] : memref<8x1xf32, #tpu.memory_space<vmem>>, vector<8x1xf32>
      %c0_15 = arith.constant 0 : index
      %c0_16 = arith.constant 0 : index
      %25 = vector.load %arg6[%c0_15, %c0_16] : memref<8x128xf32, #tpu.memory_space<vmem>>, vector<8x128xf32>
      %cst_17 = arith.constant dense<0.000000e+00> : vector<8xf32>
      %26 = vector.multi_reduction <add>, %25, %cst_17 [1] : vector<8x128xf32> to vector<8xf32>
      %27 = vector.shape_cast %26 : vector<8xf32> to vector<8x1xf32>
      %28 = math.sqrt %27 : vector<8x1xf32>
      %cst_18 = arith.constant 2.000000e+00 : f32
      %29 = vector.broadcast %cst_18 : f32 to vector<8x1xf32>
      %30 = arith.subf %29, %28 : vector<8x1xf32>
      %cst_19 = arith.constant 0.000000e+00 : f32
      %31 = vector.broadcast %cst_19 : f32 to vector<8x1xf32>
      %32 = arith.maximumf %30, %31 : vector<8x1xf32>
      %cst_20 = arith.constant 1.000000e+00 : f32
      %33 = vector.broadcast %cst_20 : f32 to vector<8x1xf32>
      %34 = arith.subf %33, %24 : vector<8x1xf32>
      %35 = arith.mulf %34, %27 : vector<8x1xf32>
      %36 = arith.mulf %32, %32 : vector<8x1xf32>
      %37 = arith.mulf %24, %36 : vector<8x1xf32>
      %38 = arith.addf %35, %37 : vector<8x1xf32>
      %39 = vector.shape_cast %38 : vector<8x1xf32> to vector<1x8x1xf32>
      %cst_21 = arith.constant dense<0.000000e+00> : vector<1xf32>
      %40 = vector.multi_reduction <add>, %39, %cst_21 [1, 2] : vector<1x8x1xf32> to vector<1xf32>
      %41 = vector.shape_cast %40 : vector<1xf32> to vector<1x1x1xf32>
      %42 = vector.extract %41[0, 0, 0] : f32 from vector<1x1x1xf32>
      %43 = tpu.iota {dimensions = array<i32: 2>} : vector<1x1x128xi32>
      %c0_i32_22 = arith.constant 0 : i32
      %44 = vector.broadcast %c0_i32_22 : i32 to vector<1x1x128xi32>
      %45 = arith.cmpi eq, %43, %44 : vector<1x1x128xi32>
      %cst_23 = arith.constant 0.000000e+00 : f32
      %46 = vector.broadcast %42 : f32 to vector<1x1x128xf32>
      %47 = vector.broadcast %cst_23 : f32 to vector<1x1x128xf32>
      %48 = arith.select %45, %46, %47 : vector<1x1x128xi1>, vector<1x1x128xf32>
      %c0_24 = arith.constant 0 : index
      %c0_25 = arith.constant 0 : index
      %c0_26 = arith.constant 0 : index
      %49 = vector.load %arg5[%c0_24, %c0_25, %c0_26] : memref<1x1x128xf32, #tpu.memory_space<vmem>>, vector<1x1x128xf32>
      tpu.vector_store %arg5[%c0_24, %c0_25, %c0_26], %48 {strides = array<i32>} : memref<1x1x128xf32, #tpu.memory_space<vmem>>, vector<1x1x128xf32>,
    } else {
    }
    return
  }
  func.func @transform_0(%arg0: i32, %arg1: i32) -> (i32, i32) {
    %c0_i32 = arith.constant 0 : i32
    return %arg0, %arg1 : i32, i32
  }
  func.func @transform_1(%arg0: i32, %arg1: i32) -> (i32, i32) {
    %c0_i32 = arith.constant 0 : i32
    return %arg0, %arg1 : i32, i32
  }
  func.func @transform_2(%arg0: i32, %arg1: i32) -> (i32, i32) {
    %c0_i32 = arith.constant 0 : i32
    %c0_i32_0 = arith.constant 0 : i32
    return %arg0, %c0_i32 : i32, i32
  }
  func.func @transform_3(%arg0: i32, %arg1: i32) -> (i32, i32, i32) {
    %c0_i32 = arith.constant 0 : i32
    %c0_i32_0 = arith.constant 0 : i32
    %c0_i32_1 = arith.constant 0 : i32
    return %arg0, %c0_i32, %c0_i32_0 : i32, i32, i32
  }
}

</mosaic_0001>

<llo_original>
// kernel: tpu_custom_call.1
$region0: #{tpu_custom_call.1}
  #allocation0 [shape = 'u32[]', space=smem, size = 0x4, offset = 0x4, fixed_abs, tag = 'smem constant byte address 0x4 - core index']
  #allocation1 [shape = 'u32[144,128]{1,0:T(1,128)}', space=vmem, size = 0x12000, scoped, tag = 'internal scratch']
  #allocation2 [shape = 'f32[8,128]{1,0:T(8,128)}', space=vmem, size = 0x1000, scoped, tag = 'scratch operand']
  %s0 = inlined_call_operand.vmem [shape: f32[8,32], index: 0, kind: input, shape index: {}]
  %s1 = inlined_call_operand.hbm [shape: f32[8,32], index: 1, kind: input, shape index: {}]
  %s2 = inlined_call_operand.vmem [shape: f32[8,1], index: 2, kind: input, shape index: {}]
  %s3 = inlined_call_operand.hbm [shape: f32[1,1,128], index: 3, kind: output, shape index: {}]
  %s4 = sld [smem:[#allocation0]]
  $region34: #{tpu_custom_call.1} parent=0
    _
  %s6 = ssub.s32 1, %s4
  %s7 = scalar_select 0, %s6, %s4
  $region1: #{tpu_custom_call.1} parent=0
    #allocation3 [shape = 'u8[4096]{0}', space=vmem, size = 0x1000, scoped, tag = 'input window, operand 1, single buffered']
    #allocation4 [shape = 's32[1]{0}', space=sflag, size = 0x4, scoped, tag = 'scoped memory for tpu_custom_call.1']
    #allocation5 [shape = 's32[1]{0}', space=sflag, size = 0x4, scoped, tag = 'scoped memory for tpu_custom_call.1']
    #allocation6 [shape = 'u8[512]{0}', space=vmem, size = 0x400, scoped, tag = 'output window, operand 0, single buffered']
    %8 = vsyncpa [#allocation4], 0
    %9 = vsyncpa [#allocation5], 0
    // Predicated region
    $region2: #{tpu_custom_call.1} parent=1 // pred_check
      _
    $region3: #{tpu_custom_call.1} parent=1 // pred_check_branch
      %11 = sbr.rel (0) target = $region5
    $region4: #{tpu_custom_call.1} parent=1 // pred_region
      _
    $region5: #{tpu_custom_call.1} parent=1 // pred_fallthru
      _
    // Predicated region
    $region6: #{tpu_custom_call.1} parent=1 // pred_check
      _
    $region7: #{tpu_custom_call.1} parent=1 // pred_check_branch
      %13 = sbr.rel (0) target = $region9
    $region8: #{tpu_custom_call.1} parent=1 // pred_region
      %s15 = ssub.s32 128, 128
      %16 = vsyncadd [#allocation4], %s15
      %s18 = sshll.u32 [#allocation3], 4
      %s19 = int_to_ptr.vmem [resolvable:$true] %s18
      %21 = dma.hbm_to_vmem [thread:$0]  %s1, 128, %s19, [#allocation4]
    $region9: #{tpu_custom_call.1} parent=1 // pred_fallthru
      _
    // Predicated region
    $region10: #{tpu_custom_call.1} parent=1 // pred_check
      _
    $region11: #{tpu_custom_call.1} parent=1 // pred_check_branch
      %23 = sbr.rel (0) target = $region13
    $region12: #{tpu_custom_call.1} parent=1 // pred_region
      _
    $region13: #{tpu_custom_call.1} parent=1 // pred_fallthru
      _
    // Predicated region
    $region14: #{tpu_custom_call.1} parent=1 // pred_check
      _
    $region15: #{tpu_custom_call.1} parent=1 // pred_check_branch
      %25 = sbr.rel (0) target = $region17
    $region16: #{tpu_custom_call.1} parent=1 // pred_region
      %26 = dma.done [#allocation4], 128
    $region17: #{tpu_custom_call.1} parent=1 // pred_fallthru
      _
    %p27 = scmp.eq.s32.totalorder 0, 0
    // Predicated region
    $region18: #{tpu_custom_call.1} parent=1 // pred_check
      %p28 = pneg %p27
    $region19: #{tpu_custom_call.1} parent=1 // pred_check_branch
      %30 = sbr.rel (%p28) target = $region21
    $region20: #{tpu_custom_call.1} parent=1 // pred_region
      %31 = vst [vmem:[#allocation2] sm:$0xff] 0.0
    $region21: #{tpu_custom_call.1} parent=1 // pred_fallthru
      _
    %v32 = vld [vmem:[%s0] sm:$0xff]
    %v33 = vld [vmem:[#allocation3] sm:$0xff]
    %v34 = vsub.f32 %v32, %v33
    %v35 = vadd.f32 %v34, 1e-06
    %v36 = vmul.f32 %v35, %v35
    %vm37 = vcmask 261120
    %v38 = vsel %vm37, %v36, 0.0
    %39 = vadd.xlane.f32.xlu0 %v38
    %v40 = vpop.xlane.xlu0 %39
    %v41 = vlaneseq
    %v42 = vand.u32 %v41, 127
    %v43 = vld [vmem:[#allocation2] sm:$0xff]
    %vm44 = vcmp.eq.s32.totalorder %v42, 0
    %v45 = vsel %vm44, %v40, 0.0
    %v46 = vadd.f32 %v43, %v45
    %47 = vst [vmem:[#allocation2] sm:$0xff] %v46
    // Predicated region
    $region22: #{tpu_custom_call.1} parent=1 // pred_check
      %p48 = pneg %p27
    $region23: #{tpu_custom_call.1} parent=1 // pred_check_branch
      %50 = sbr.rel (%p48) target = $region25
    $region24: #{tpu_custom_call.1} parent=1 // pred_region
      %v51 = vld [vmem:[%s2] sm:$0xff]
      %v52 = vld [vmem:[#allocation2] sm:$0xff]
      %53 = vadd.xlane.f32.xlu0 %v52
      %v54 = vpop.xlane.xlu0 %53
      %v55 = vrsqrt.pop %v54
      %v56 = vmul.f32 %v54, %v55
      %vm57 = vcmp.eq.f32.partialorder %v54, inf
      %v58 = vsel %vm57, %v54, %v56
      %vm59 = vcmp.eq.f32.partialorder %v54, 0.0
      %v60 = vand.u32 %v54, 2147483648
      %v61 = vsel %vm59, %v60, %v58
      %v62 = vsub.f32 2.0, %v61
      %v63 = vmax.f32 %v62, 0.0
      %v64 = vsub.f32 1.0, %v51
      %v65 = vmul.f32 %v64, %v54
      %v66 = vmul.f32 %v63, %v63
      %v67 = vmul.f32 %v51, %v66
      %v68 = vadd.f32 %v65, %v67
      %vm69 = vcmask 7168
      %v70 = vsel %vm69, %v68, 0.0
      %71 = vadd.xlane.f32.xlu0 %v70
      %v72 = vpop.xlane.xlu0 %71
      %v73 = vrot.slane %v72, 4
      %v74 = vadd.f32 %v72, %v73
      %v75 = vrot.slane %v74, 2
      %v76 = vadd.f32 %v74, %v75
      %v77 = vrot.slane %v76, 1
      %v78 = vadd.f32 %v76, %v77
      %s79 = vtos %v78
      %v80 = vstv %s79
      %v81 = vsel %vm44, %v80, 0.0
      %82 = vst [vmem:[#allocation6] sm:$0x1] %v81
    $region25: #{tpu_custom_call.1} parent=1 // pred_fallthru
      _
    // Predicated region
    $region26: #{tpu_custom_call.1} parent=1 // pred_check
      _
    $region27: #{tpu_custom_call.1} parent=1 // pred_check_branch
      %84 = sbr.rel (0) target = $region29
    $region28: #{tpu_custom_call.1} parent=1 // pred_region
      %s86 = ssub.s32 16, 16
      %87 = vsyncadd [#allocation5], %s86
      %s89 = sshll.u32 [#allocation6], 4
      %s90 = int_to_ptr.vmem [resolvable:$true] %s89
      %92 = dma.vmem_to_hbm [thread:$0]  %s90, 16, %s3, [#allocation5]
    $region29: #{tpu_custom_call.1} parent=1 // pred_fallthru
      _
    // Predicated region
    $region30: #{tpu_custom_call.1} parent=1 // pred_check
      _
    $region31: #{tpu_custom_call.1} parent=1 // pred_check_branch
      %94 = sbr.rel (0) target = $region33
    $region32: #{tpu_custom_call.1} parent=1 // pred_region
      %95 = dma.done [#allocation5], 16
    $region33: #{tpu_custom_call.1} parent=1 // pred_fallthru
      _
    %96 = vsyncpa [#allocation4], 1
    %97 = vsyncpa [#allocation5], 1

</llo_original>
